<compile_context>
chip_gen: v5e
topology: v5e:2x2
jax: 0.10.0
libtpu: 0.0.40
codegen_flags: <defaults>
</compile_context>

<pallas_src>
import jax
import jax.numpy as jnp
from jax.experimental import pallas as pl
from jax.experimental.pallas import tpu as pltpu

_LANE = 128  # TPU lane width; pad the output/class dim to this for dense stores.


def _fused_linear_kernel(x_ref, w_ref, b_ref, o_ref):
    # Single fused layer: (B, In) @ (In, Cpad) + (1, Cpad)
    acc = jnp.dot(x_ref[...], w_ref[...], preferred_element_type=jnp.float32)
    o_ref[...] = (acc + b_ref[...]).astype(o_ref.dtype)


def prepare_params(w1, b1, w2, b2):
    """One-time parameter prep (outside the per-call hot path).

    w1: (H, In), b1: (H,), w2: (C, H), b2: (C,)  -- PyTorch nn.Linear layout.
    Returns lane-padded fused weight (In, Cpad), fused bias (1, Cpad), and C.
    """
    w_fused = jnp.dot(w1.T, w2.T)          # (In, C)
    b_fused = jnp.dot(b1, w2.T) + b2       # (C,)
    num_classes = w_fused.shape[1]

    c_pad = max(_LANE, ((num_classes + _LANE - 1) // _LANE) * _LANE)
    pad = c_pad - num_classes
    w_fused = jnp.pad(w_fused, ((0, 0), (0, pad)))
    b_fused = jnp.pad(b_fused, (0, pad)).reshape(1, c_pad)
    return w_fused, b_fused, num_classes


def classification_forward(x, w_fused, b_fused, num_classes, *, batch_tile=512):
    """x: (B, In); w_fused: (In, Cpad); b_fused: (1, Cpad). Returns (B, C)."""
    B, In = x.shape
    Cp = w_fused.shape[1]
    out_dtype = x.dtype

    if B <= batch_tile or B % batch_tile != 0:
        # Overhead-minimal path: no grid, no pipelining; whole operands in VMEM.
        out_padded = pl.pallas_call(
            _fused_linear_kernel,
            out_shape=jax.ShapeDtypeStruct((B, Cp), out_dtype),
            in_specs=[
                pl.BlockSpec(memory_space=pltpu.MemorySpace.VMEM),
                pl.BlockSpec(memory_space=pltpu.MemorySpace.VMEM),
                pl.BlockSpec(memory_space=pltpu.MemorySpace.VMEM),
            ],
            out_specs=pl.BlockSpec(memory_space=pltpu.MemorySpace.VMEM),
        )(x, w_fused, b_fused)
    else:
        # Scaled-batch path: tile the batch, keep fused weight/bias resident,
        # and mark the batch axis parallel (megacore sharding on v7x).
        grid = (B // batch_tile,)
        out_padded = pl.pallas_call(
            _fused_linear_kernel,
            out_shape=jax.ShapeDtypeStruct((B, Cp), out_dtype),
            grid_spec=pltpu.PrefetchScalarGridSpec(
                num_scalar_prefetch=0,
                grid=grid,
                in_specs=[
                    pl.BlockSpec((batch_tile, In), lambda i: (i, 0)),
                    pl.BlockSpec((In, Cp), lambda i: (0, 0)),
                    pl.BlockSpec((1, Cp), lambda i: (0, 0)),
                ],
                out_specs=pl.BlockSpec((batch_tile, Cp), lambda i: (i, 0)),
            ),
            compiler_params=pltpu.CompilerParams(
                dimension_semantics=("parallel",),
            ),
        )(x, w_fused, b_fused)

    # Strip lane padding back to the true class count.
    return out_padded[:, :num_classes]


if __name__ == "__main__":
    # Small shapes consistent with the module's forward:
    #   input_size=32, hidden_size=64, num_classes=16, batch=8
    batch, input_size, hidden_size, num_classes = 8, 32, 64, 16

    key = jax.random.PRNGKey(0)
    kx, kw1, kb1, kw2, kb2 = jax.random.split(key, 5)

    x = jax.random.normal(kx, (batch, input_size), dtype=jnp.float32)
    # Deterministic parameter init (uniform like PyTorch's default Linear init).
    lim1 = 1.0 / (input_size ** 0.5)
    lim2 = 1.0 / (hidden_size ** 0.5)
    w1 = jax.random.uniform(kw1, (hidden_size, input_size), jnp.float32, -lim1, lim1)
    b1 = jax.random.uniform(kb1, (hidden_size,), jnp.float32, -lim1, lim1)
    w2 = jax.random.uniform(kw2, (num_classes, hidden_size), jnp.float32, -lim2, lim2)
    b2 = jax.random.uniform(kb2, (num_classes,), jnp.float32, -lim2, lim2)

    # One-time parameter fusion + padding (outside the per-call hot path).
    w_fused, b_fused, n_cls = prepare_params(w1, b1, w2, b2)
    w_fused, b_fused = jax.block_until_ready((w_fused, b_fused))

    out = classification_forward(x, w_fused, b_fused, n_cls)
    jax.block_until_ready(out)

    # Pure-JAX reference (original two-matmul form).
    ref = (x @ w1.T + b1) @ w2.T + b2
    assert out.shape == (batch, num_classes)
    assert jnp.allclose(out, ref, atol=1e-4, rtol=1e-4)

    print("KERNEL_OK")
</pallas_src>

<mosaic_0001>
module attributes {stable_mosaic.version = 11 : i64} {
  func.func @_fused_linear_kernel(%arg0: memref<8x32xf32, #tpu.memory_space<vmem>>, %arg1: memref<32x128xf32, #tpu.memory_space<vmem>>, %arg2: memref<1x128xf32, #tpu.memory_space<vmem>>, %arg3: memref<8x128xf32, #tpu.memory_space<vmem>>) attributes {dimension_semantics = [], scalar_prefetch = 0 : i64, scratch_operands = 0 : i64, tpu.core_type = #tpu.core_type<tc>} {
    %c0 = arith.constant 0 : index
    %c0_0 = arith.constant 0 : index
    %0 = vector.load %arg0[%c0, %c0_0] : memref<8x32xf32, #tpu.memory_space<vmem>>, vector<8x32xf32>
    %c0_1 = arith.constant 0 : index
    %c0_2 = arith.constant 0 : index
    %1 = vector.load %arg1[%c0_1, %c0_2] : memref<32x128xf32, #tpu.memory_space<vmem>>, vector<32x128xf32>
    %cst = arith.constant dense<0.000000e+00> : vector<8x128xf32>
    %2 = tpu.matmul %0, %1, %cst {dimension_numbers = #tpu.dot_dimension_numbers<[1], [0], [0], [1], [0, 0, 1, 1], [], []>} : vector<8x32xf32>, vector<32x128xf32>, vector<8x128xf32> -> vector<8x128xf32>
    %c0_3 = arith.constant 0 : index
    %c0_4 = arith.constant 0 : index
    %3 = vector.load %arg2[%c0_3, %c0_4] : memref<1x128xf32, #tpu.memory_space<vmem>>, vector<1x128xf32>
    %4 = vector.broadcast %3 : vector<1x128xf32> to vector<8x128xf32>
    %5 = arith.addf %2, %4 : vector<8x128xf32>
    %c0_5 = arith.constant 0 : index
    %c0_6 = arith.constant 0 : index
    %6 = vector.load %arg3[%c0_5, %c0_6] : memref<8x128xf32, #tpu.memory_space<vmem>>, vector<8x128xf32>
    tpu.vector_store %arg3[%c0_5, %c0_6], %5 {strides = array<i32>} : memref<8x128xf32, #tpu.memory_space<vmem>>, vector<8x128xf32>,
    return
  }
}

</mosaic_0001>

<llo_original>
// kernel: tpu_custom_call.1
$region0: #{tpu_custom_call.1}
  #allocation0 [shape = 'u32[]', space=smem, size = 0x4, offset = 0x4, fixed_abs, tag = 'smem constant byte address 0x4 - core index']
  #allocation1 [shape = 'u32[72,128]{1,0:T(1,128)}', space=vmem, size = 0x9000, scoped, tag = 'internal scratch']
  %s0 = inlined_call_operand.hbm [shape: f32[8,32], index: 0, kind: input, shape index: {}]
  %s1 = inlined_call_operand.hbm [shape: f32[32,128], index: 1, kind: input, shape index: {}]
  %s2 = inlined_call_operand.vmem [shape: f32[1,128], index: 2, kind: input, shape index: {}]
  %s3 = inlined_call_operand.hbm [shape: f32[8,128], index: 3, kind: output, shape index: {}]
  %s4 = sld [smem:[#allocation0]]
  $region30: #{tpu_custom_call.1} parent=0
    _
  %s6 = ssub.s32 1, %s4
  %s7 = scalar_select 0, %s6, %s4
  $region1: #{tpu_custom_call.1} parent=0
    #allocation2 [shape = 'u8[4096]{0}', space=vmem, size = 0x1000, scoped, tag = 'input window, operand 0, single buffered']
    #allocation3 [shape = 's32[1]{0}', space=sflag, size = 0x4, scoped, tag = 'scoped memory for tpu_custom_call.1']
    #allocation4 [shape = 's32[1]{0}', space=sflag, size = 0x4, scoped, tag = 'scoped memory for tpu_custom_call.1']
    #allocation5 [shape = 'u8[16384]{0}', space=vmem, size = 0x4000, scoped, tag = 'input window, operand 1, single buffered']
    #allocation6 [shape = 's32[1]{0}', space=sflag, size = 0x4, scoped, tag = 'scoped memory for tpu_custom_call.1']
    #allocation7 [shape = 'u8[4096]{0}', space=vmem, size = 0x1000, scoped, tag = 'output window, operand 0, single buffered']
    %8 = vsyncpa [#allocation3], 0
    %9 = vsyncpa [#allocation6], 0
    %10 = vsyncpa [#allocation4], 0
    // Predicated region
    $region2: #{tpu_custom_call.1} parent=1 // pred_check
      _
    $region3: #{tpu_custom_call.1} parent=1 // pred_check_branch
      %12 = sbr.rel (0) target = $region5
    $region4: #{tpu_custom_call.1} parent=1 // pred_region
      %14 = vsyncadd [#allocation3], 0
      %s16 = sshll.u32 %s0, 4
      %s17 = int_to_ptr.hbm [resolvable:$true] %s16
      %s18 = sshll.u32 [#allocation2], 4
      %s19 = int_to_ptr.vmem [resolvable:$true] %s18
      %21 = dma.hbm_to_vmem [thread:$0]  %s17, 128, %s19, [#allocation3]
    $region5: #{tpu_custom_call.1} parent=1 // pred_fallthru
      _
    // Predicated region
    $region6: #{tpu_custom_call.1} parent=1 // pred_check
      _
    $region7: #{tpu_custom_call.1} parent=1 // pred_check_branch
      %23 = sbr.rel (0) target = $region9
    $region8: #{tpu_custom_call.1} parent=1 // pred_region
      %25 = vsyncadd [#allocation6], 0
      %s26 = sshll.u32 %s1, 4
      %s27 = int_to_ptr.hbm [resolvable:$true] %s26
      %s28 = sshll.u32 [#allocation5], 4
      %s29 = int_to_ptr.vmem [resolvable:$true] %s28
      %34 = dma.hbm_to_vmem [thread:$0]  %s27, 512, %s29, [#allocation6], 128, 128, 8
    $region9: #{tpu_custom_call.1} parent=1 // pred_fallthru
      _
    // Predicated region
    $region10: #{tpu_custom_call.1} parent=1 // pred_check
      _
    $region11: #{tpu_custom_call.1} parent=1 // pred_check_branch
      %36 = sbr.rel (0) target = $region13
    $region12: #{tpu_custom_call.1} parent=1 // pred_region
      _
    $region13: #{tpu_custom_call.1} parent=1 // pred_fallthru
      _
    // Predicated region
    $region14: #{tpu_custom_call.1} parent=1 // pred_check
      _
    $region15: #{tpu_custom_call.1} parent=1 // pred_check_branch
      %38 = sbr.rel (0) target = $region17
    $region16: #{tpu_custom_call.1} parent=1 // pred_region
      %40 = dma.done [#allocation3], 128
    $region17: #{tpu_custom_call.1} parent=1 // pred_fallthru
      _
    // Predicated region
    $region18: #{tpu_custom_call.1} parent=1 // pred_check
      _
    $region19: #{tpu_custom_call.1} parent=1 // pred_check_branch
      %42 = sbr.rel (0) target = $region21
    $region20: #{tpu_custom_call.1} parent=1 // pred_region
      %44 = dma.done [#allocation6], 512
    $region21: #{tpu_custom_call.1} parent=1 // pred_fallthru
      _
    %v45 = vld [vmem:[#allocation2] sm:$0xff]
    %v46 = vld [vmem:[#allocation5] sm:$0xff]
    %v47 = vld [vmem:[#allocation5 + $0x8] sm:$0xff]
    %v48 = vld [vmem:[#allocation5 + $0x10] sm:$0xff]
    %v49 = vld [vmem:[#allocation5 + $0x18] sm:$0xff]
    %v50 = vld [vmem:[%s2] sm:$0x1]
    %v52 = vperm.slane %v50, 0
    %vm54 = vcmask 261120
    %v56 = vsel %vm54, %v45, 0
    %58 = vmatpush.msra.mxu0 0.0
    %59 = vmatpush.msra.mxu0 0.0
    %60 = vmatpush.msra.mxu0 0.0
    %61 = vmatpush.msra.mxu0 0.0
    %62 = vmatpush.msra.mxu0 0.0
    %63 = vmatpush.msra.mxu0 0.0
    %64 = vmatpush.msra.mxu0 0.0
    %65 = vmatpush.msra.mxu0 0.0
    %66 = vmatpush.msra.mxu0 0.0
    %67 = vmatpush.msra.mxu0 0.0
    %68 = vmatpush.msra.mxu0 0.0
    %69 = vmatpush.msra.mxu0 0.0
    %70 = vmatpush.msra.mxu0 %v49
    %71 = vmatpush.msra.mxu0 %v48
    %72 = vmatpush.msra.mxu0 %v47
    %73 = vmatpush.msra.mxu0 %v46
    %74 = vmatmul.f32.gmra.mxu0 %v56
    %v75 = vpop.f32.mrf.mxu0
    %v76 = vadd.f32 %v52, %v75
    %77 = vdwg.mxu0
    %78 = vst [vmem:[#allocation7] sm:$0xff] %v76
    // Predicated region
    $region22: #{tpu_custom_call.1} parent=1 // pred_check
      _
    $region23: #{tpu_custom_call.1} parent=1 // pred_check_branch
      %80 = sbr.rel (0) target = $region25
    $region24: #{tpu_custom_call.1} parent=1 // pred_region
      %82 = vsyncadd [#allocation4], 0
      %s84 = sshll.u32 [#allocation7], 4
      %s85 = int_to_ptr.vmem [resolvable:$true] %s84
      %s86 = sshll.u32 %s3, 4
      %s87 = int_to_ptr.hbm [resolvable:$true] %s86
      %89 = dma.vmem_to_hbm [thread:$0]  %s85, 128, %s87, [#allocation4]
    $region25: #{tpu_custom_call.1} parent=1 // pred_fallthru
      _
    // Predicated region
    $region26: #{tpu_custom_call.1} parent=1 // pred_check
      _
    $region27: #{tpu_custom_call.1} parent=1 // pred_check_branch
      %91 = sbr.rel (0) target = $region29
    $region28: #{tpu_custom_call.1} parent=1 // pred_region
      %93 = dma.done [#allocation4], 128
    $region29: #{tpu_custom_call.1} parent=1 // pred_fallthru
      _
    %94 = vsyncpa [#allocation3], 1
    %95 = vsyncpa [#allocation6], 1
    %96 = vsyncpa [#allocation4], 1

</llo_original>
